<compile_context>
chip_gen: v6e
topology: v6e:2x2x1
jax: 0.10.0
libtpu: 0.0.40
codegen_flags: <defaults>
</compile_context>

<pallas_src>
import jax
import jax.numpy as jnp
from jax import lax
from jax.experimental import pallas as pl
from jax.experimental.pallas import tpu as pltpu


def _round_up(n, m):
    return ((n + m - 1) // m) * m


def _kmeans_dist_kernel(x_ref, cneg2_ref, c2_ref, o_ref):
    # x_ref:     (TB, D) f32 tile of points (pipelined over the batch)
    # cneg2_ref: (K, D)  resident centroids, pre-scaled by -2 (bf16 or f32)
    # c2_ref:    (1, K)  resident precomputed ||c||^2 (f32)
    # o_ref:     (TB, K) pairwise Euclidean distances
    x = x_ref[...]                                        # (TB, D) f32
    x2 = jnp.sum(x * x, axis=1, keepdims=True)            # (TB, 1) f32, exact norms

    # -2 <x, c> on the MXU (bf16 operands, f32 accumulation), contracting feature dims
    # of both operands directly -> no transpose of the resident centroid tile.
    xc_neg2 = lax.dot_general(
        x.astype(cneg2_ref.dtype), cneg2_ref[...],
        dimension_numbers=(((1,), (1,)), ((), ())),
        preferred_element_type=jnp.float32,
    )                                                     # (TB, K) f32

    d2 = x2 + c2_ref[...] + xc_neg2                       # ||x||^2 + ||c||^2 - 2<x,c>
    # Clamp tiny negatives from cancellation before the sqrt (EUP).
    o_ref[...] = jnp.sqrt(jnp.maximum(d2, 0.0)).astype(o_ref.dtype)


def kmeans_dist(x, centroids, *, tb_max=2048, use_bf16_dot=True,
                vmem_budget_bytes=12 * 1024 * 1024):
    """Pairwise L2 distances between x (B, D) and centroids (K, D) -> (B, K)."""
    B, D = x.shape
    K, D2 = centroids.shape
    assert D == D2, "feature dims must match"

    x = x.astype(jnp.float32)
    centroids = centroids.astype(jnp.float32)

    # Hoisted, resident side inputs (computed once, f32-exact squared norms).
    c2 = jnp.sum(centroids * centroids, axis=1, keepdims=True).T       # (1, K) f32
    dot_dtype = jnp.bfloat16 if use_bf16_dot else jnp.float32
    cneg2 = (-2.0 * centroids).astype(dot_dtype)                       # (K, D)

    # ---- Batch tile selection -------------------------------------------------
    # Double-buffered bytes per batch row: x tile (f32, D) + out tile (f32, K).
    bytes_per_row = 2 * 4 * (D + K)
    resident_bytes = 2 * K * D * cneg2.dtype.itemsize + 2 * 4 * K
    tb = max(8, ((vmem_budget_bytes - resident_bytes) // bytes_per_row) // 8 * 8)
    tb = min(tb, tb_max, _round_up(B, 8))
    # Give the v7x megacore at least two grid steps for moderate batches.
    if B >= 1024 and pl.cdiv(B, tb) < 2:
        tb = max(8, _round_up((B + 1) // 2, 8))

    grid = (pl.cdiv(B, tb),)   # partial last tile: OOB reads padded, OOB writes dropped

    out = pl.pallas_call(
        _kmeans_dist_kernel,
        out_shape=jax.ShapeDtypeStruct((B, K), jnp.float32),
        grid_spec=pltpu.PrefetchScalarGridSpec(
            num_scalar_prefetch=0,
            grid=grid,
            in_specs=[
                pl.BlockSpec((tb, D), lambda i: (i, 0)),   # x tile (pipelined)
                pl.BlockSpec((K, D), lambda i: (0, 0)),    # -2 * centroids (resident)
                pl.BlockSpec((1, K), lambda i: (0, 0)),    # ||c||^2 (resident)
            ],
            out_specs=pl.BlockSpec((tb, K), lambda i: (i, 0)),
        ),
        compiler_params=pltpu.CompilerParams(
            dimension_semantics=("parallel",),             # batch shards across TCs
        ),
    )(x, cneg2, c2)

    return out


def kmeans_dist_ref(x, centroids):
    # Pure-JAX reference matching the PyTorch forward exactly.
    z = x[:, None, :]                 # (B, 1, D)
    mu = centroids[None]              # (1, K, D)
    return jnp.linalg.norm(z - mu, ord=2, axis=2)


if __name__ == "__main__":
    key = jax.random.PRNGKey(0)
    k_x, k_c = jax.random.split(key)

    B = 8            # small batch of points for the smoke test
    D = 512          # feature dim fixed by the module
    K = 16           # num_centroids

    x = jax.random.normal(k_x, (B, D), dtype=jnp.float32)
    # Deterministic "parameter" init (stand-in for torch.randn(num_centroids, 512)).
    centroids = jax.random.normal(k_c, (K, D), dtype=jnp.float32)

    ref = kmeans_dist_ref(x, centroids)

    # Default path: bf16 MXU cross term, f32 everywhere else.
    out = jax.block_until_ready(kmeans_dist(x, centroids))
    assert out.shape == (B, K)
    assert jnp.allclose(out, ref, atol=3e-2, rtol=1e-3), "bf16-dot path mismatch"

    # Full-f32 path (tight tolerance, matches reference numerics).
    out_f32 = jax.block_until_ready(kmeans_dist(x, centroids, use_bf16_dot=False))
    assert jnp.allclose(out_f32, ref, atol=1e-3, rtol=1e-3), "f32 path mismatch"

    print("KERNEL_OK")
</pallas_src>

<mosaic_0001>
module attributes {stable_mosaic.version = 11 : i64} {
  func.func @_kmeans_dist_kernel(%arg0: i32, %arg1: memref<8x512xf32, #tpu.memory_space<vmem>>, %arg2: memref<16x512xbf16, #tpu.memory_space<vmem>>, %arg3: memref<1x16xf32, #tpu.memory_space<vmem>>, %arg4: memref<8x16xf32, #tpu.memory_space<vmem>>) attributes {dimension_semantics = [#tpu.dimension_semantics<parallel>], iteration_bounds = array<i64: 1>, scalar_prefetch = 0 : i64, scratch_operands = 0 : i64, tpu.core_type = #tpu.core_type<tc>, window_params = [{transform_indices = @transform_0, window_bounds = array<i64: 8, 512>}, {pipeline_mode = #tpu.pipeline_mode<synchronous>, transform_indices = @transform_1, window_bounds = array<i64: 16, 512>}, {pipeline_mode = #tpu.pipeline_mode<synchronous>, transform_indices = @transform_2, window_bounds = array<i64: 1, 16>}, {transform_indices = @transform_3, window_bounds = array<i64: 8, 16>}]} {
    %c0 = arith.constant 0 : index
    %c0_0 = arith.constant 0 : index
    %0 = vector.load %arg1[%c0, %c0_0] : memref<8x512xf32, #tpu.memory_space<vmem>>, vector<8x512xf32>
    %1 = arith.mulf %0, %0 : vector<8x512xf32>
    %cst = arith.constant dense<0.000000e+00> : vector<8xf32>
    %2 = vector.multi_reduction <add>, %1, %cst [1] : vector<8x512xf32> to vector<8xf32>
    %3 = vector.shape_cast %2 : vector<8xf32> to vector<8x1xf32>
    %4 = arith.truncf %0 : vector<8x512xf32> to vector<8x512xbf16>
    %c0_1 = arith.constant 0 : index
    %c0_2 = arith.constant 0 : index
    %5 = vector.load %arg2[%c0_1, %c0_2] : memref<16x512xbf16, #tpu.memory_space<vmem>>, vector<16x512xbf16>
    %cst_3 = arith.constant dense<0.000000e+00> : vector<8x16xf32>
    %6 = tpu.matmul %4, %5, %cst_3 {dimension_numbers = #tpu.dot_dimension_numbers<[1], [1], [0], [0], [0, 0, 1, 0], [], []>} : vector<8x512xbf16>, vector<16x512xbf16>, vector<8x16xf32> -> vector<8x16xf32>
    %c0_4 = arith.constant 0 : index
    %c0_5 = arith.constant 0 : index
    %7 = vector.load %arg3[%c0_4, %c0_5] : memref<1x16xf32, #tpu.memory_space<vmem>>, vector<1x16xf32>
    %8 = vector.broadcast %3 : vector<8x1xf32> to vector<8x16xf32>
    %9 = vector.broadcast %7 : vector<1x16xf32> to vector<8x16xf32>
    %10 = arith.addf %8, %9 : vector<8x16xf32>
    %11 = arith.addf %10, %6 : vector<8x16xf32>
    %cst_6 = arith.constant 0.000000e+00 : f32
    %12 = vector.broadcast %cst_6 : f32 to vector<8x16xf32>
    %13 = arith.maximumf %11, %12 : vector<8x16xf32>
    %14 = math.sqrt %13 : vector<8x16xf32>
    %c0_7 = arith.constant 0 : index
    %c0_8 = arith.constant 0 : index
    %15 = vector.load %arg4[%c0_7, %c0_8] : memref<8x16xf32, #tpu.memory_space<vmem>>, vector<8x16xf32>
    tpu.vector_store %arg4[%c0_7, %c0_8], %14 {strides = array<i32>} : memref<8x16xf32, #tpu.memory_space<vmem>>, vector<8x16xf32>,
    return
  }
  func.func @transform_0(%arg0: i32) -> (i32, i32) {
    %c0_i32 = arith.constant 0 : i32
    %c0_i32_0 = arith.constant 0 : i32
    return %arg0, %c0_i32 : i32, i32
  }
  func.func @transform_1(%arg0: i32) -> (i32, i32) {
    %c0_i32 = arith.constant 0 : i32
    %c0_i32_0 = arith.constant 0 : i32
    %c0_i32_1 = arith.constant 0 : i32
    return %c0_i32, %c0_i32_0 : i32, i32
  }
  func.func @transform_2(%arg0: i32) -> (i32, i32) {
    %c0_i32 = arith.constant 0 : i32
    %c0_i32_0 = arith.constant 0 : i32
    %c0_i32_1 = arith.constant 0 : i32
    return %c0_i32, %c0_i32_0 : i32, i32
  }
  func.func @transform_3(%arg0: i32) -> (i32, i32) {
    %c0_i32 = arith.constant 0 : i32
    %c0_i32_0 = arith.constant 0 : i32
    return %arg0, %c0_i32 : i32, i32
  }
}

</mosaic_0001>

<llo_original>
// kernel: tpu_custom_call.1
$region0: #{tpu_custom_call.1}
  #allocation0 [shape = 'u32[]', space=smem, size = 0x4, offset = 0x4, fixed_abs, tag = 'smem constant byte address 0x4 - core index']
  #allocation1 [shape = 'u32[144,128]{1,0:T(1,128)}', space=vmem, size = 0x12000, scoped, tag = 'internal scratch']
  %s0 = inlined_call_operand.hbm [shape: f32[8,512], index: 0, kind: input, shape index: {}]
  %s1 = inlined_call_operand.hbm [shape: bf16[16,512], index: 1, kind: input, shape index: {}]
  %s2 = inlined_call_operand.vmem [shape: f32[1,16], index: 2, kind: input, shape index: {}]
  %s3 = inlined_call_operand.hbm [shape: f32[8,16], index: 3, kind: output, shape index: {}]
  %s4 = sld [smem:[#allocation0]]
  $region30: #{tpu_custom_call.1} parent=0
    _
  %s6 = ssub.s32 1, %s4
  %s7 = scalar_select 0, %s6, %s4
  $region1: #{tpu_custom_call.1} parent=0
    #allocation2 [shape = 'u8[16384]{0}', space=vmem, size = 0x4000, scoped, tag = 'input window, operand 0, single buffered']
    #allocation3 [shape = 's32[1]{0}', space=sflag, size = 0x4, scoped, tag = 'scoped memory for tpu_custom_call.1']
    #allocation4 [shape = 's32[1]{0}', space=sflag, size = 0x4, scoped, tag = 'scoped memory for tpu_custom_call.1']
    #allocation5 [shape = 'u8[16384]{0}', space=vmem, size = 0x4000, scoped, tag = 'input window, operand 1, single buffered']
    #allocation6 [shape = 's32[1]{0}', space=sflag, size = 0x4, scoped, tag = 'scoped memory for tpu_custom_call.1']
    #allocation7 [shape = 'u8[4096]{0}', space=vmem, size = 0x1000, scoped, tag = 'output window, operand 0, single buffered']
    %8 = vsyncpa [#allocation3], 0
    %9 = vsyncpa [#allocation6], 0
    %10 = vsyncpa [#allocation4], 0
    // Predicated region
    $region2: #{tpu_custom_call.1} parent=1 // pred_check
      _
    $region3: #{tpu_custom_call.1} parent=1 // pred_check_branch
      %12 = sbr.rel (0) target = $region5
    $region4: #{tpu_custom_call.1} parent=1 // pred_region
      %s14 = ssub.s32 512, 512
      %15 = vsyncadd [#allocation3], %s14
      %s17 = sshll.u32 [#allocation2], 4
      %s18 = int_to_ptr.vmem [resolvable:$true] %s17
      %20 = dma.hbm_to_vmem [thread:$0]  %s0, 512, %s18, [#allocation3]
    $region5: #{tpu_custom_call.1} parent=1 // pred_fallthru
      _
    // Predicated region
    $region6: #{tpu_custom_call.1} parent=1 // pred_check
      _
    $region7: #{tpu_custom_call.1} parent=1 // pred_check_branch
      %22 = sbr.rel (0) target = $region9
    $region8: #{tpu_custom_call.1} parent=1 // pred_region
      %s24 = ssub.s32 512, 512
      %25 = vsyncadd [#allocation6], %s24
      %s26 = sshll.u32 [#allocation5], 4
      %s27 = int_to_ptr.vmem [resolvable:$true] %s26
      %32 = dma.hbm_to_vmem [thread:$0]  %s1, 512, %s27, [#allocation6], 256, 256, 16
    $region9: #{tpu_custom_call.1} parent=1 // pred_fallthru
      _
    // Predicated region
    $region10: #{tpu_custom_call.1} parent=1 // pred_check
      _
    $region11: #{tpu_custom_call.1} parent=1 // pred_check_branch
      %34 = sbr.rel (0) target = $region13
    $region12: #{tpu_custom_call.1} parent=1 // pred_region
      _
    $region13: #{tpu_custom_call.1} parent=1 // pred_fallthru
      _
    // Predicated region
    $region14: #{tpu_custom_call.1} parent=1 // pred_check
      _
    $region15: #{tpu_custom_call.1} parent=1 // pred_check_branch
      %36 = sbr.rel (0) target = $region17
    $region16: #{tpu_custom_call.1} parent=1 // pred_region
      %37 = dma.done [#allocation3], 512
    $region17: #{tpu_custom_call.1} parent=1 // pred_fallthru
      _
    // Predicated region
    $region18: #{tpu_custom_call.1} parent=1 // pred_check
      _
    $region19: #{tpu_custom_call.1} parent=1 // pred_check_branch
      %39 = sbr.rel (0) target = $region21
    $region20: #{tpu_custom_call.1} parent=1 // pred_region
      %40 = dma.done [#allocation6], 512
    $region21: #{tpu_custom_call.1} parent=1 // pred_fallthru
      _
    %v42 = vld [vmem:[#allocation2] sm:$0xff]
    %v43 = vld [vmem:[#allocation2 + $0x8] sm:$0xff]
    %v44 = vld [vmem:[#allocation2 + $0x10] sm:$0xff]
    %v45 = vld [vmem:[#allocation2 + $0x18] sm:$0xff]
    %v46 = vmul.f32 %v42, %v42
    %v47 = vmul.f32 %v43, %v43
    %v48 = vmul.f32 %v44, %v44
    %v49 = vmul.f32 %v45, %v45
    %v50 = vadd.f32 %v46, %v47
    %v51 = vadd.f32 %v50, %v48
    %v52 = vadd.f32 %v51, %v49
    %53 = vadd.xlane.f32.xlu0 %v52
    %v54 = vpop.xlane.xlu0 %53
    %v55 = vpack.c.bf16 %v42, %v42
    %v56 = vpack.c.bf16 %v43, %v43
    %v57 = vpack.c.bf16 %v44, %v44
    %v58 = vpack.c.bf16 %v45, %v45
    %v59 = vld [vmem:[#allocation5] sm:$0xff]
    %v60 = vld [vmem:[#allocation5 + $0x8] sm:$0xff]
    %v61 = vld [vmem:[#allocation5 + $0x10] sm:$0xff]
    %v62 = vld [vmem:[#allocation5 + $0x18] sm:$0xff]
    %v67 = vunpack.c.l.b16 %v59
    %v68 = vunpack.c.h.b16 %v59
    %v69 = vunpack.c.l.b16 %v60
    %v70 = vunpack.c.h.b16 %v60
    %v71 = vunpack.c.l.b16 %v61
    %v72 = vunpack.c.h.b16 %v61
    %v73 = vunpack.c.l.b16 %v62
    %v74 = vunpack.c.h.b16 %v62
    %v75 = vpack.c.b16 %v71, %v67
    %v76 = vpack.c.b16 %v72, %v68
    %v77 = vpack.c.b16 %v73, %v69
    %v78 = vpack.c.b16 %v74, %v70
    %83 = vmatprep.subr.bf16.mxu0 0
    %84 = vmatpush1.bf16.xpose.msra.mxu0 0
    %85 = vmatprep.subr.bf16.mxu0 0
    %86 = vmatpush1.bf16.xpose.msra.mxu0 0
    %87 = vmatprep.subr.bf16.mxu0 0
    %88 = vmatpush1.bf16.xpose.msra.mxu0 0
    %89 = vmatprep.subr.bf16.mxu0 0
    %90 = vmatpush1.bf16.xpose.msra.mxu0 0
    %91 = vmatprep.subr.bf16.mxu0 0
    %92 = vmatpush1.bf16.xpose.msra.mxu0 0
    %93 = vmatprep.subr.bf16.mxu0 0
    %94 = vmatpush1.bf16.xpose.msra.mxu0 0
    %95 = vmatprep.subr.bf16.mxu0 0
    %96 = vmatpush1.bf16.xpose.msra.mxu0 0
    %97 = vmatprep.subr.bf16.mxu0 %v76
    %98 = vmatpush1.bf16.xpose.msra.mxu0 %v75
    %99 = vmatprep.subr.bf16.mxu0 0
    %100 = vmatpush2.bf16.xpose.msra.mxu0 0
    %101 = vmatprep.subr.bf16.mxu0 0
    %102 = vmatpush2.bf16.xpose.msra.mxu0 0
    %103 = vmatprep.subr.bf16.mxu0 0
    %104 = vmatpush2.bf16.xpose.msra.mxu0 0
    %105 = vmatprep.subr.bf16.mxu0 0
    %106 = vmatpush2.bf16.xpose.msra.mxu0 0
    %107 = vmatprep.subr.bf16.mxu0 0
    %108 = vmatpush2.bf16.xpose.msra.mxu0 0
    %109 = vmatprep.subr.bf16.mxu0 0
    %110 = vmatpush2.bf16.xpose.msra.mxu0 0
    %111 = vmatprep.subr.bf16.mxu0 0
    %112 = vmatpush2.bf16.xpose.msra.mxu0 0
    %113 = vmatprep.subr.bf16.mxu0 0
    %114 = vmatpush2.bf16.xpose.msra.mxu0 0
    %115 = vmatprep.mubr.bf16.mxu0 %v56
    %116 = vmatmul.mubr.bf16.gmra.mxu0 %v55
    %v117 = vpop.f32.mrf.mxu0
    %v118 = vadd.f32 0.0, %v117
    %v119 = vpop.f32.mrf.mxu0
    %v120 = vpop.f32.mrf.mxu0
    %v121 = vpop.f32.mrf.mxu0
    %122 = vdwg.mxu0
    %123 = vmatprep.subr.bf16.mxu0 0
    %124 = vmatpush1.bf16.xpose.msra.mxu0 0
    %125 = vmatprep.subr.bf16.mxu0 0
    %126 = vmatpush1.bf16.xpose.msra.mxu0 0
    %127 = vmatprep.subr.bf16.mxu0 0
    %128 = vmatpush1.bf16.xpose.msra.mxu0 0
    %129 = vmatprep.subr.bf16.mxu0 0
    %130 = vmatpush1.bf16.xpose.msra.mxu0 0
    %131 = vmatprep.subr.bf16.mxu0 0
    %132 = vmatpush1.bf16.xpose.msra.mxu0 0
    %133 = vmatprep.subr.bf16.mxu0 0
    %134 = vmatpush1.bf16.xpose.msra.mxu0 0
    %135 = vmatprep.subr.bf16.mxu0 0
    %136 = vmatpush1.bf16.xpose.msra.mxu0 0
    %137 = vmatprep.subr.bf16.mxu0 %v78
    %138 = vmatpush1.bf16.xpose.msra.mxu0 %v77
    %139 = vmatprep.subr.bf16.mxu0 0
    %140 = vmatpush2.bf16.xpose.msra.mxu0 0
    %141 = vmatprep.subr.bf16.mxu0 0
    %142 = vmatpush2.bf16.xpose.msra.mxu0 0
    %143 = vmatprep.subr.bf16.mxu0 0
    %144 = vmatpush2.bf16.xpose.msra.mxu0 0
    %145 = vmatprep.subr.bf16.mxu0 0
    %146 = vmatpush2.bf16.xpose.msra.mxu0 0
    %147 = vmatprep.subr.bf16.mxu0 0
    %148 = vmatpush2.bf16.xpose.msra.mxu0 0
    %149 = vmatprep.subr.bf16.mxu0 0
    %150 = vmatpush2.bf16.xpose.msra.mxu0 0
    %151 = vmatprep.subr.bf16.mxu0 0
    %152 = vmatpush2.bf16.xpose.msra.mxu0 0
    %153 = vmatprep.subr.bf16.mxu0 0
    %154 = vmatpush2.bf16.xpose.msra.mxu0 0
    %155 = vmatprep.mubr.bf16.mxu0 %v58
    %156 = vmatmul.mubr.bf16.gmra.mxu0 %v57
    %v157 = vpop.f32.mrf.mxu0
    %v158 = vadd.f32 %v118, %v157
    %v159 = vpop.f32.mrf.mxu0
    %v160 = vpop.f32.mrf.mxu0
    %v161 = vpop.f32.mrf.mxu0
    %162 = vdwg.mxu0
    %v163 = vld [vmem:[%s2] sm:$0x1]
    %v165 = vlaneseq
    %v166 = vshrl.u32 %v165, 7
    %v167 = vsub.s32 0, %v166
    %v168 = vrot.slane %v163, %v167
    %v170 = vadd.f32 %v54, %v168
    %v171 = vadd.f32 %v170, %v158
    %v172 = vmax.f32 %v171, 0.0
    %v173 = vrsqrt.pop %v172
    %v174 = vmul.f32 %v172, %v173
    %vm175 = vcmp.eq.f32.partialorder %v172, inf
    %v176 = vsel %vm175, %v172, %v174
    %vm177 = vcmp.eq.f32.partialorder %v172, 0.0
    %v178 = vand.u32 %v172, 2147483648
    %v179 = vsel %vm177, %v178, %v176
    %vm180 = vcmask 130048
    %181 = vst.msk [vmem:[#allocation7] sm:$0xff] %vm180, %v179
    // Predicated region
    $region22: #{tpu_custom_call.1} parent=1 // pred_check
      _
    $region23: #{tpu_custom_call.1} parent=1 // pred_check_branch
      %183 = sbr.rel (0) target = $region25
    $region24: #{tpu_custom_call.1} parent=1 // pred_region
      %s185 = ssub.s32 128, 128
      %186 = vsyncadd [#allocation4], %s185
      %s188 = sshll.u32 [#allocation7], 4
      %s189 = int_to_ptr.vmem [resolvable:$true] %s188
      %191 = dma.vmem_to_hbm [thread:$0]  %s189, 128, %s3, [#allocation4]
    $region25: #{tpu_custom_call.1} parent=1 // pred_fallthru
      _
    // Predicated region
    $region26: #{tpu_custom_call.1} parent=1 // pred_check
      _
    $region27: #{tpu_custom_call.1} parent=1 // pred_check_branch
      %193 = sbr.rel (0) target = $region29
    $region28: #{tpu_custom_call.1} parent=1 // pred_region
      %194 = dma.done [#allocation4], 128
    $region29: #{tpu_custom_call.1} parent=1 // pred_fallthru
      _
    %195 = vsyncpa [#allocation3], 1
    %196 = vsyncpa [#allocation6], 1
    %197 = vsyncpa [#allocation4], 1

</llo_original>
